<compile_context>
chip_gen: v7x
topology: tpu7x:2x2x1
jax: 0.10.0
libtpu: 0.0.40
codegen_flags: <defaults>
</compile_context>

<pallas_src>
import functools

import jax
import jax.numpy as jnp
from jax.experimental import pallas as pl
from jax.experimental.pallas import tpu as pltpu

LANE = 128


def _round_up(n, m):
    return ((n + m - 1) // m) * m


def _pad2(x, rows, cols):
    r, c = x.shape
    return jnp.pad(x, ((0, rows - r), (0, cols - c)))


def fasttext_kernel(tok_ref, emb_ref, w1_ref, b1_ref, w2_ref, b2_ref, o_ref,
                    *, seq_len):
    """One batch tile: fused embedding-gather + fc1 + relu + max_L + fc2.

    tok_ref: (tile_b*L, 1) int32 token ids for this batch tile
    emb_ref: (Vp, Ep) bf16 zero-padded embedding table (resident in VMEM)
    w1_ref:  (Ep, Hp) bf16     b1_ref: (1, Hp) f32
    w2_ref:  (Hp, Tp) bf16     b2_ref: (1, Tp) f32
    o_ref:   (tile_b, Tp) f32 logits (lane-dense; sliced to T outside)
    """
    bl = tok_ref.shape[0]                      # tile_b * L
    tile_b = bl // seq_len
    vocab_p = emb_ref.shape[0]

    # ---- Embedding gather fused as a one-hot MXU matmul (no HBM round trip).
    tok_col = tok_ref[...]                                        # (BL, 1) i32
    vocab_iota = jax.lax.broadcasted_iota(jnp.int32, (bl, vocab_p), 1)
    onehot = (vocab_iota == tok_col).astype(jnp.bfloat16)         # (BL, Vp) bf16
    # Exact row selection: each product is 1.0 * bf16 value, f32 accumulation.
    x = jnp.dot(onehot, emb_ref[...],
                preferred_element_type=jnp.float32)               # (BL, Ep) f32
    # Dropout is identity in eval mode.
    # TODO(synk): training-mode dropout (random masking) is not implemented.

    # ---- fc1: single dense 2-D bf16 matmul on the MXU, f32 accumulation.
    h = jnp.dot(x.astype(jnp.bfloat16), w1_ref[...],
                preferred_element_type=jnp.float32)               # (BL, Hp)
    h = jnp.maximum(h + b1_ref[...], 0.0)                         # bias+relu, f32 VPU

    # ---- permute + MaxPool1d(L) + squeeze == max over the sequence axis.
    # (BL, Hp) -> (tile_b, L, Hp) is the natural sublane split (free); the
    # reduction over axis=1 is a sublane/XLU reduce.
    pooled = jnp.max(h.reshape(tile_b, seq_len, h.shape[-1]), axis=1)  # (tile_b, Hp)

    # ---- fc2 (lane-dense padded output; zero-padded cols stay zero).
    out = jnp.dot(pooled.astype(jnp.bfloat16), w2_ref[...],
                  preferred_element_type=jnp.float32) + b2_ref[...]
    o_ref[...] = out.astype(o_ref.dtype)


@functools.partial(jax.jit, static_argnames=("tile_b",))
def fasttext_forward(tokens, embedding, w1, b1, w2, b2, *, tile_b=8):
    """tokens: (B, L) int32. Returns logits (B, T) float32."""
    B, L = tokens.shape
    V, E = embedding.shape
    H = w1.shape[1]
    T = w2.shape[1]
    assert B % tile_b == 0, "batch must be a multiple of the batch tile"

    # Lane-dense padding (multiples of 128) for every last dim.
    Vp, Ep, Hp, Tp = (_round_up(d, LANE) for d in (V, E, H, T))

    # Weights/table cast to bf16 for the MXU (halves weight DMA bytes);
    # biases stay f32 (added post-matmul on the VPU).
    emb_p = _pad2(embedding, Vp, Ep).astype(jnp.bfloat16)
    w1_p = _pad2(w1, Ep, Hp).astype(jnp.bfloat16)
    b1_p = _pad2(b1.reshape(1, -1), 1, Hp).astype(jnp.float32)
    w2_p = _pad2(w2, Hp, Tp).astype(jnp.bfloat16)
    b2_p = _pad2(b2.reshape(1, -1), 1, Tp).astype(jnp.float32)

    # Flatten tokens to (B*L, 1) so the kernel never needs a lane-axis reshape.
    tok_flat = tokens.astype(jnp.int32).reshape(B * L, 1)

    # TODO(synk): for large vocabularies (table >> VMEM) replace the resident
    # one-hot gather with a scalar-prefetch / DMA row gather; for long
    # sequences tile L with a running-max VMEM scratch (pl.when init at l==0).
    grid = (B // tile_b,)
    kernel = functools.partial(fasttext_kernel, seq_len=L)

    out_p = pl.pallas_call(
        kernel,
        out_shape=jax.ShapeDtypeStruct((B, Tp), jnp.float32),
        grid_spec=pltpu.PrefetchScalarGridSpec(
            num_scalar_prefetch=0,
            grid=grid,
            in_specs=[
                pl.BlockSpec((tile_b * L, 1), lambda i: (i, 0)),   # tokens tile
                pl.BlockSpec((Vp, Ep), lambda i: (0, 0)),          # embedding
                pl.BlockSpec((Ep, Hp), lambda i: (0, 0)),          # w1
                pl.BlockSpec((1, Hp), lambda i: (0, 0)),           # b1
                pl.BlockSpec((Hp, Tp), lambda i: (0, 0)),          # w2
                pl.BlockSpec((1, Tp), lambda i: (0, 0)),           # b2
            ],
            out_specs=pl.BlockSpec((tile_b, Tp), lambda i: (i, 0)),
        ),
        compiler_params=pltpu.CompilerParams(
            # Batch tiles are independent -> megacore-shardable on v7x.
            dimension_semantics=("parallel",),
            vmem_limit_bytes=32 * 1024 * 1024,   # safe on v5e/v6e/v7x
        ),
    )(tok_flat, emb_p, w1_p, b1_p, w2_p, b2_p)

    return out_p[:, :T]


def xavier_normal(key, shape_out_in):
    fan_out, fan_in = shape_out_in
    std = (2.0 / (fan_in + fan_out)) ** 0.5
    return std * jax.random.normal(key, shape_out_in, dtype=jnp.float32)


if __name__ == "__main__":
    # Small config consistent with the module.
    vocab_size = 64
    embedding_size = 32   # E
    hidden_size = 32      # H
    num_tags = 8          # T
    max_seq_len = 8       # L
    batch = 16            # B (multiple of tile_b=8 -> 2 parallel batch tiles)

    key = jax.random.PRNGKey(0)
    k_emb, k_w1, k_w2, k_tok = jax.random.split(key, 4)

    # nn.Embedding default init: N(0,1); padding_idx=0 row zeroed.
    embedding = jax.random.normal(k_emb, (vocab_size, embedding_size),
                                  dtype=jnp.float32)
    embedding = embedding.at[0].set(0.0)

    # fc1/fc2: xavier_normal_ weights, zero biases (as in init_parameters).
    # PyTorch stores W as (out, in); transpose to (in, out) for the kernel.
    w1 = xavier_normal(k_w1, (hidden_size, embedding_size)).T     # (E, H)
    b1 = jnp.zeros((hidden_size,), dtype=jnp.float32)
    w2 = xavier_normal(k_w2, (num_tags, hidden_size)).T           # (H, T)
    b2 = jnp.zeros((num_tags,), dtype=jnp.float32)

    tokens = jax.random.randint(k_tok, (batch, max_seq_len), 0, vocab_size,
                                dtype=jnp.int32)

    out = fasttext_forward(tokens, embedding, w1, b1, w2, b2)
    out = jax.block_until_ready(out)
    assert out.shape == (batch, num_tags), out.shape

    # Pure-JAX reference that mirrors the kernel's bf16 matmul-input casts
    # (f32 accumulation).  Tolerance loosened vs a pure-f32 check because
    # MXU inputs are bf16.
    def bf(x):
        return x.astype(jnp.bfloat16).astype(jnp.float32)

    x_emb = jnp.take(bf(embedding), tokens, axis=0)               # (B, L, E)
    h_ref = jnp.maximum(jnp.einsum("ble,eh->blh", bf(x_emb), bf(w1)) + b1, 0.0)
    pooled_ref = jnp.max(h_ref, axis=1)                           # (B, H)
    ref = bf(pooled_ref) @ bf(w2) + b2                            # (B, T)
    err = jnp.max(jnp.abs(out - ref))
    assert jnp.allclose(out, ref, atol=1e-2, rtol=1e-2), err

    print("KERNEL_OK")
</pallas_src>

<mosaic_0001>
module attributes {stable_mosaic.version = 11 : i64} {
  func.func @fasttext_kernel(%arg0: i32, %arg1: memref<64x1xi32, #tpu.memory_space<vmem>>, %arg2: memref<128x128xbf16, #tpu.memory_space<vmem>>, %arg3: memref<128x128xbf16, #tpu.memory_space<vmem>>, %arg4: memref<1x128xf32, #tpu.memory_space<vmem>>, %arg5: memref<128x128xbf16, #tpu.memory_space<vmem>>, %arg6: memref<1x128xf32, #tpu.memory_space<vmem>>, %arg7: memref<8x128xf32, #tpu.memory_space<vmem>>) attributes {dimension_semantics = [#tpu.dimension_semantics<parallel>], iteration_bounds = array<i64: 2>, scalar_prefetch = 0 : i64, scratch_operands = 0 : i64, tpu.core_type = #tpu.core_type<tc>, window_params = [{transform_indices = @transform_0, window_bounds = array<i64: 64, 1>}, {pipeline_mode = #tpu.pipeline_mode<synchronous>, transform_indices = @transform_1, window_bounds = array<i64: 128, 128>}, {pipeline_mode = #tpu.pipeline_mode<synchronous>, transform_indices = @transform_2, window_bounds = array<i64: 128, 128>}, {pipeline_mode = #tpu.pipeline_mode<synchronous>, transform_indices = @transform_3, window_bounds = array<i64: 1, 128>}, {pipeline_mode = #tpu.pipeline_mode<synchronous>, transform_indices = @transform_4, window_bounds = array<i64: 128, 128>}, {pipeline_mode = #tpu.pipeline_mode<synchronous>, transform_indices = @transform_5, window_bounds = array<i64: 1, 128>}, {transform_indices = @transform_6, window_bounds = array<i64: 8, 128>}]} {
    %c0 = arith.constant 0 : index
    %c0_0 = arith.constant 0 : index
    %0 = vector.load %arg1[%c0, %c0_0] : memref<64x1xi32, #tpu.memory_space<vmem>>, vector<64x1xi32>
    %1 = tpu.iota {dimensions = array<i32: 1>} : vector<64x128xi32>
    %2 = vector.broadcast %0 : vector<64x1xi32> to vector<64x128xi32>
    %3 = arith.cmpi eq, %1, %2 : vector<64x128xi32>
    %4 = arith.extui %3 : vector<64x128xi1> to vector<64x128xi32>
    %5 = arith.sitofp %4 : vector<64x128xi32> to vector<64x128xf32>
    %6 = arith.truncf %5 : vector<64x128xf32> to vector<64x128xbf16>
    %c0_1 = arith.constant 0 : index
    %c0_2 = arith.constant 0 : index
    %7 = vector.load %arg2[%c0_1, %c0_2] : memref<128x128xbf16, #tpu.memory_space<vmem>>, vector<128x128xbf16>
    %cst = arith.constant dense<0.000000e+00> : vector<64x128xf32>
    %8 = tpu.matmul %6, %7, %cst {dimension_numbers = #tpu.dot_dimension_numbers<[1], [0], [0], [1], [0, 0, 1, 1], [], []>} : vector<64x128xbf16>, vector<128x128xbf16>, vector<64x128xf32> -> vector<64x128xf32>
    %9 = arith.truncf %8 : vector<64x128xf32> to vector<64x128xbf16>
    %c0_3 = arith.constant 0 : index
    %c0_4 = arith.constant 0 : index
    %10 = vector.load %arg3[%c0_3, %c0_4] : memref<128x128xbf16, #tpu.memory_space<vmem>>, vector<128x128xbf16>
    %cst_5 = arith.constant dense<0.000000e+00> : vector<64x128xf32>
    %11 = tpu.matmul %9, %10, %cst_5 {dimension_numbers = #tpu.dot_dimension_numbers<[1], [0], [0], [1], [0, 0, 1, 1], [], []>} : vector<64x128xbf16>, vector<128x128xbf16>, vector<64x128xf32> -> vector<64x128xf32>
    %c0_6 = arith.constant 0 : index
    %c0_7 = arith.constant 0 : index
    %12 = vector.load %arg4[%c0_6, %c0_7] : memref<1x128xf32, #tpu.memory_space<vmem>>, vector<1x128xf32>
    %13 = vector.broadcast %12 : vector<1x128xf32> to vector<64x128xf32>
    %14 = arith.addf %11, %13 : vector<64x128xf32>
    %cst_8 = arith.constant 0.000000e+00 : f32
    %15 = vector.broadcast %cst_8 : f32 to vector<64x128xf32>
    %16 = arith.maximumf %14, %15 : vector<64x128xf32>
    %17 = vector.shape_cast %16 : vector<64x128xf32> to vector<8x8x128xf32>
    %cst_9 = arith.constant dense<0xFF800000> : vector<8x128xf32>
    %18 = vector.multi_reduction <maximumf>, %17, %cst_9 [1] : vector<8x8x128xf32> to vector<8x128xf32>
    %19 = arith.truncf %18 : vector<8x128xf32> to vector<8x128xbf16>
    %c0_10 = arith.constant 0 : index
    %c0_11 = arith.constant 0 : index
    %20 = vector.load %arg5[%c0_10, %c0_11] : memref<128x128xbf16, #tpu.memory_space<vmem>>, vector<128x128xbf16>
    %cst_12 = arith.constant dense<0.000000e+00> : vector<8x128xf32>
    %21 = tpu.matmul %19, %20, %cst_12 {dimension_numbers = #tpu.dot_dimension_numbers<[1], [0], [0], [1], [0, 0, 1, 1], [], []>} : vector<8x128xbf16>, vector<128x128xbf16>, vector<8x128xf32> -> vector<8x128xf32>
    %c0_13 = arith.constant 0 : index
    %c0_14 = arith.constant 0 : index
    %22 = vector.load %arg6[%c0_13, %c0_14] : memref<1x128xf32, #tpu.memory_space<vmem>>, vector<1x128xf32>
    %23 = vector.broadcast %22 : vector<1x128xf32> to vector<8x128xf32>
    %24 = arith.addf %21, %23 : vector<8x128xf32>
    %c0_15 = arith.constant 0 : index
    %c0_16 = arith.constant 0 : index
    %25 = vector.load %arg7[%c0_15, %c0_16] : memref<8x128xf32, #tpu.memory_space<vmem>>, vector<8x128xf32>
    tpu.vector_store %arg7[%c0_15, %c0_16], %24 {strides = array<i32>} : memref<8x128xf32, #tpu.memory_space<vmem>>, vector<8x128xf32>,
    return
  }
  func.func @transform_0(%arg0: i32) -> (i32, i32) {
    %c0_i32 = arith.constant 0 : i32
    %c0_i32_0 = arith.constant 0 : i32
    return %arg0, %c0_i32 : i32, i32
  }
  func.func @transform_1(%arg0: i32) -> (i32, i32) {
    %c0_i32 = arith.constant 0 : i32
    %c0_i32_0 = arith.constant 0 : i32
    %c0_i32_1 = arith.constant 0 : i32
    return %c0_i32, %c0_i32_0 : i32, i32
  }
  func.func @transform_2(%arg0: i32) -> (i32, i32) {
    %c0_i32 = arith.constant 0 : i32
    %c0_i32_0 = arith.constant 0 : i32
    %c0_i32_1 = arith.constant 0 : i32
    return %c0_i32, %c0_i32_0 : i32, i32
  }
  func.func @transform_3(%arg0: i32) -> (i32, i32) {
    %c0_i32 = arith.constant 0 : i32
    %c0_i32_0 = arith.constant 0 : i32
    %c0_i32_1 = arith.constant 0 : i32
    return %c0_i32, %c0_i32_0 : i32, i32
  }
  func.func @transform_4(%arg0: i32) -> (i32, i32) {
    %c0_i32 = arith.constant 0 : i32
    %c0_i32_0 = arith.constant 0 : i32
    %c0_i32_1 = arith.constant 0 : i32
    return %c0_i32, %c0_i32_0 : i32, i32
  }
  func.func @transform_5(%arg0: i32) -> (i32, i32) {
    %c0_i32 = arith.constant 0 : i32
    %c0_i32_0 = arith.constant 0 : i32
    %c0_i32_1 = arith.constant 0 : i32
    return %c0_i32, %c0_i32_0 : i32, i32
  }
  func.func @transform_6(%arg0: i32) -> (i32, i32) {
    %c0_i32 = arith.constant 0 : i32
    %c0_i32_0 = arith.constant 0 : i32
    return %arg0, %c0_i32 : i32, i32
  }
}

</mosaic_0001>

<llo_original>
// kernel: fasttext_forward.1
$region0: #{fasttext_forward.1}
  #allocation0 [shape = 'u32[]', space=smem, size = 0x4, offset = 0x4, fixed_abs, tag = 'smem constant byte address 0x4 - core index']
  #allocation1 [shape = 'u32[144,128]{1,0:T(1,128)}', space=vmem, size = 0x12000, scoped, tag = 'internal scratch']
  %s0 = inlined_call_operand.vmem [shape: s32[128,1], index: 0, kind: input, shape index: {}]
  %s1 = inlined_call_operand.vmem [shape: bf16[128,128], index: 1, kind: input, shape index: {}]
  %s2 = inlined_call_operand.vmem [shape: bf16[128,128], index: 2, kind: input, shape index: {}]
  %s3 = inlined_call_operand.vmem [shape: f32[1,128], index: 3, kind: input, shape index: {}]
  %s4 = inlined_call_operand.vmem [shape: bf16[128,128], index: 4, kind: input, shape index: {}]
  %s5 = inlined_call_operand.vmem [shape: f32[1,128], index: 5, kind: input, shape index: {}]
  %s6 = inlined_call_operand.vmem [shape: f32[16,128], index: 6, kind: output, shape index: {}]
  %s7 = sld [smem:[#allocation0]]
  $region57: #{fasttext_forward.1} parent=0
    _
  %s9 = ssub.s32 1, %s7
  %s10 = scalar_select 0, %s9, %s7
  loop: start=0, step=1, limit=4
  $region2: #{fasttext_forward.1} parent=0 // loop_pre_header
    _
  $region3: #{fasttext_forward.1} parent=0 // loop_header
    %s12 = sphi 0, %s16
    %p13 = scmp.ge.s32.totalorder %s12, 4
    %s22 = sphi 0, %s24
    %s25 = sphi 0, %s22
    %s26 = sphi 0, %s25
    %s42 = sphi 0, %s26
    %s46 = sphi 0, %s46
    %s48 = sphi 0, %s46
    %s49 = sphi 0, %s48
    %s63 = sphi 0, %s49
    %s67 = sphi 0, %s67
    %s69 = sphi 0, %s67
    %s70 = sphi 0, %s69
    %s84 = sphi 0, %s70
    %s88 = sphi 0, %s88
    %s90 = sphi 0, %s88
    %s91 = sphi 0, %s90
    %s105 = sphi 0, %s91
    %s109 = sphi 0, %s109
    %s111 = sphi 0, %s109
    %s112 = sphi 0, %s111
    %s126 = sphi 0, %s112
    %s130 = sphi 0, %s130
    %s132 = sphi 0, %s130
    %s133 = sphi 0, %s132
    %s147 = sphi 0, %s133
    %s153 = sphi 0, %s155
    %s156 = sphi 0, %s153
    %s157 = sphi 0, %s156
    %s173 = sphi 0, %s157
  $region4: #{fasttext_forward.1} parent=0 // loop_header_branch
    %15 = sbr.rel (%p13) target = $region8
  $region5: #{fasttext_forward.1} parent=0 // loop_body
    %s17 = ssub.s32 %s12, 1
    %s18 = ssub.s32 %s12, 2
    %s19 = sadd.s32 %s12, 1
    %s20 = ssub.s32 %s12, %s19
    %p21 = scmp.eq.s32.totalorder %s20, 0
    %s23 = sadd.s32 %s22, 1
    %s24 = scalar_select %p21, %s22, %s23
    %p27 = pneg %p21
    %p28 = scmp.eq.s32.totalorder %s12, 1
    %p29 = por %p27, %p28
    %p30 = scmp.ne.s32.totalorder %s22, %s25
    %p31 = scmp.eq.s32.totalorder %s12, 0
    %p32 = por %p30, %p31
    %p33 = scmp.ne.s32.totalorder %s22, %s25
    %p34 = scmp.eq.s32.totalorder %s17, 1
    %p35 = por %p33, %p34
    %p36 = scmp.ne.s32.totalorder %s25, %s26
    %p37 = scmp.eq.s32.totalorder %s17, 0
    %p38 = por %p36, %p37
    %p39 = scmp.ne.s32.totalorder %s25, %s26
    %p40 = scmp.eq.s32.totalorder %s18, 1
    %p41 = por %p39, %p40
    %p43 = scmp.ne.s32.totalorder %s26, %s42
    %p44 = scmp.eq.s32.totalorder %s18, 0
    %p45 = por %p43, %p44
    %s47 = sadd.s32 %s46, 1
    %p50 = scmp.eq.s32.totalorder %s12, 1
    %p51 = scmp.ne.s32.totalorder %s46, %s48
    %p52 = scmp.eq.s32.totalorder %s12, 0
    %p53 = por %p51, %p52
    %p54 = scmp.ne.s32.totalorder %s46, %s48
    %p55 = scmp.eq.s32.totalorder %s17, 1
    %p56 = por %p54, %p55
    %p57 = scmp.ne.s32.totalorder %s48, %s49
    %p58 = scmp.eq.s32.totalorder %s17, 0
    %p59 = por %p57, %p58
    %p60 = scmp.ne.s32.totalorder %s48, %s49
    %p61 = scmp.eq.s32.totalorder %s18, 1
    %p62 = por %p60, %p61
    %p64 = scmp.ne.s32.totalorder %s49, %s63
    %p65 = scmp.eq.s32.totalorder %s18, 0
    %p66 = por %p64, %p65
    %s68 = sadd.s32 %s67, 1
    %p71 = scmp.eq.s32.totalorder %s12, 1
    %p72 = scmp.ne.s32.totalorder %s67, %s69
    %p73 = scmp.eq.s32.totalorder %s12, 0
    %p74 = por %p72, %p73
    %p75 = scmp.ne.s32.totalorder %s67, %s69
    %p76 = scmp.eq.s32.totalorder %s17, 1
    %p77 = por %p75, %p76
    %p78 = scmp.ne.s32.totalorder %s69, %s70
    %p79 = scmp.eq.s32.totalorder %s17, 0
    %p80 = por %p78, %p79
    %p81 = scmp.ne.s32.totalorder %s69, %s70
    %p82 = scmp.eq.s32.totalorder %s18, 1
    %p83 = por %p81, %p82
    %p85 = scmp.ne.s32.totalorder %s70, %s84
    %p86 = scmp.eq.s32.totalorder %s18, 0
    %p87 = por %p85, %p86
    %s89 = sadd.s32 %s88, 1
    %p92 = scmp.eq.s32.totalorder %s12, 1
    %p93 = scmp.ne.s32.totalorder %s88, %s90
    %p94 = scmp.eq.s32.totalorder %s12, 0
    %p95 = por %p93, %p94
    %p96 = scmp.ne.s32.totalorder %s88, %s90
    %p97 = scmp.eq.s32.totalorder %s17, 1
    %p98 = por %p96, %p97
    %p99 = scmp.ne.s32.totalorder %s90, %s91
    %p100 = scmp.eq.s32.totalorder %s17, 0
    %p101 = por %p99, %p100
    %p102 = scmp.ne.s32.totalorder %s90, %s91
    %p103 = scmp.eq.s32.totalorder %s18, 1
    %p104 = por %p102, %p103
    %p106 = scmp.ne.s32.totalorder %s91, %s105
    %p107 = scmp.eq.s32.totalorder %s18, 0
    %p108 = por %p106, %p107
    %s110 = sadd.s32 %s109, 1
    %p113 = scmp.eq.s32.totalorder %s12, 1
    %p114 = scmp.ne.s32.totalorder %s109, %s111
    %p115 = scmp.eq.s32.totalorder %s12, 0
    %p116 = por %p114, %p115
    %p117 = scmp.ne.s32.totalorder %s109, %s111
    %p118 = scmp.eq.s32.totalorder %s17, 1
    %p119 = por %p117, %p118
    %p120 = scmp.ne.s32.totalorder %s111, %s112
    %p121 = scmp.eq.s32.totalorder %s17, 0
    %p122 = por %p120, %p121
    %p123 = scmp.ne.s32.totalorder %s111, %s112
    %p124 = scmp.eq.s32.totalorder %s18, 1
    %p125 = por %p123, %p124
    %p127 = scmp.ne.s32.totalorder %s112, %s126
    %p128 = scmp.eq.s32.totalorder %s18, 0
    %p129 = por %p127, %p128
    %s131 = sadd.s32 %s130, 1
    %p134 = scmp.eq.s32.totalorder %s12, 1
    %p135 = scmp.ne.s32.totalorder %s130, %s132
    %p136 = scmp.eq.s32.totalorder %s12, 0
    %p137 = por %p135, %p136
    %p138 = scmp.ne.s32.totalorder %s130, %s132
    %p139 = scmp.eq.s32.totalorder %s17, 1
    %p140 = por %p138, %p139
    %p141 = scmp.ne.s32.totalorder %s132, %s133
    %p142 = scmp.eq.s32.totalorder %s17, 0
    %p143 = por %p141, %p142
    %p144 = scmp.ne.s32.totalorder %s132, %s133
    %p145 = scmp.eq.s32.totalorder %s18, 1
    %p146 = por %p144, %p145
    %p148 = scmp.ne.s32.totalorder %s133, %s147
    %p149 = scmp.eq.s32.totalorder %s18, 0
    %p150 = por %p148, %p149
    %s151 = ssub.s32 %s12, %s19
    %p152 = scmp.eq.s32.totalorder %s151, 0
    %s154 = sadd.s32 %s153, 1
    %s155 = scalar_select %p152, %s153, %s154
    %p158 = pneg %p152
    %p159 = scmp.eq.s32.totalorder %s12, 1
    %p160 = por %p158, %p159
    %p161 = scmp.ne.s32.totalorder %s153, %s156
    %p162 = scmp.eq.s32.totalorder %s12, 0
    %p163 = por %p161, %p162
    %p164 = scmp.ne.s32.totalorder %s153, %s156
    %p165 = scmp.eq.s32.totalorder %s17, 1
    %p166 = por %p164, %p165
    %p167 = scmp.ne.s32.totalorder %s156, %s157
    %p168 = scmp.eq.s32.totalorder %s17, 0
    %p169 = por %p167, %p168
    %p170 = scmp.ne.s32.totalorder %s156, %s157
    %p171 = scmp.eq.s32.totalorder %s18, 1
    %p172 = por %p170, %p171
    %p174 = scmp.ne.s32.totalorder %s157, %s173
    %p175 = scmp.eq.s32.totalorder %s18, 0
    %p176 = por %p174, %p175
    %p177 = scmp.le.s32.totalorder 1, %s12
    %p178 = scmp.lt.s32.totalorder %s12, 3
    %p179 = pnand %p177, %p178
    %p180 = pneg %p179
    // Predicated region
    $region9: #{fasttext_forward.1} parent=5 // pred_check
      _
    $region10: #{fasttext_forward.1} parent=5 // pred_check_branch
      %182 = sbr.rel (%p179) target = $region12
    $region11: #{fasttext_forward.1} parent=5 // pred_region
      %s183 = ssub.s32 %s12, 1
      // Predicated region
      $region13: #{fasttext_forward.1} parent=11 // pred_check
        %p184 = pneg %p59
      $region14: #{fasttext_forward.1} parent=11 // pred_check_branch
        %186 = sbr.rel (%p184) target = $region16
      $region15: #{fasttext_forward.1} parent=11 // pred_region
        _
      $region16: #{fasttext_forward.1} parent=11 // pred_fallthru
        _
      // Predicated region
      $region17: #{fasttext_forward.1} parent=11 // pred_check
        %p187 = pneg %p80
      $region18: #{fasttext_forward.1} parent=11 // pred_check_branch
        %189 = sbr.rel (%p187) target = $region20
      $region19: #{fasttext_forward.1} parent=11 // pred_region
        _
      $region20: #{fasttext_forward.1} parent=11 // pred_fallthru
        _
      // Predicated region
      $region21: #{fasttext_forward.1} parent=11 // pred_check
        %p190 = pneg %p101
      $region22: #{fasttext_forward.1} parent=11 // pred_check_branch
        %192 = sbr.rel (%p190) target = $region24
      $region23: #{fasttext_forward.1} parent=11 // pred_region
        _
      $region24: #{fasttext_forward.1} parent=11 // pred_fallthru
        _
      // Predicated region
      $region25: #{fasttext_forward.1} parent=11 // pred_check
        %p193 = pneg %p122
      $region26: #{fasttext_forward.1} parent=11 // pred_check_branch
        %195 = sbr.rel (%p193) target = $region28
      $region27: #{fasttext_forward.1} parent=11 // pred_region
        _
      $region28: #{fasttext_forward.1} parent=11 // pred_fallthru
        _
      // Predicated region
      $region29: #{fasttext_forward.1} parent=11 // pred_check
        %p196 = pneg %p143
      $region30: #{fasttext_forward.1} parent=11 // pred_check_branch
        %198 = sbr.rel (%p196) target = $region32
      $region31: #{fasttext_forward.1} parent=11 // pred_region
        _
      $region32: #{fasttext_forward.1} parent=11 // pred_fallthru
        _
    $region12: #{fasttext_forward.1} parent=5 // pred_fallthru
      _
    %p199 = scmp.lt.s32.totalorder %s12, 2
    // Predicated region
    $region33: #{fasttext_forward.1} parent=5 // pred_check
      %p200 = pneg %p199
    $region34: #{fasttext_forward.1} parent=5 // pred_check_branch
      %202 = sbr.rel (%p200) target = $region36
    $region35: #{fasttext_forward.1} parent=5 // pred_region
      // Predicated region
      $region37: #{fasttext_forward.1} parent=35 // pred_check
        %p203 = pneg %p32
      $region38: #{fasttext_forward.1} parent=35 // pred_check_branch
        %205 = sbr.rel (%p203) target = $region40
      $region39: #{fasttext_forward.1} parent=35 // pred_region
        %s206 = smul.u32 8, %s12
        %p207 = scmp.lt.s32.totalorder %s206, 15
        %s208 = scalar_select %p207, %s206, 15
        %s209 = smul.addr %s208, 8
        %s210 = scalar_lea.vmem %s0, %s209
        %s211 = smul.u32 8, %s12
      $region40: #{fasttext_forward.1} parent=35 // pred_fallthru
        _
    $region36: #{fasttext_forward.1} parent=5 // pred_fallthru
      _
    %p212 = scmp.le.s32.totalorder 1, %s12
    %p213 = scmp.lt.s32.totalorder %s12, 3
    %p214 = pnand %p212, %p213
    %p215 = pneg %p214
    // Predicated region
    $region41: #{fasttext_forward.1} parent=5 // pred_check
      _
    $region42: #{fasttext_forward.1} parent=5 // pred_check_branch
      %217 = sbr.rel (%p214) target = $region44
    $region43: #{fasttext_forward.1} parent=5 // pred_region
      %s218 = ssub.s32 %s12, 1
      %s219 = smul.u32 8, %s17
      %p220 = scmp.lt.s32.totalorder %s219, 15
      %s221 = scalar_select %p220, %s219, 15
      %s222 = smul.addr %s221, 8
      %s223 = scalar_lea.vmem %s0, %s222
      %p224 = pneg %p38
      %p225 = pneg %p35
      %p226 = pneg %p59
      %p227 = pneg %p56
      %p228 = pneg %p80
      %p229 = pneg %p77
      %p230 = pneg %p101
      %p231 = pneg %p98
      %p232 = pneg %p122
      %p233 = pneg %p119
      %p234 = pneg %p143
      %p235 = pneg %p140
      %p236 = pneg %p169
      %p237 = pneg %p166
      %p238 = scmp.lt.s32.totalorder %s17, 1
      %s239 = scalar_select %p238, %s17, 1
      %s240 = smul.addr %s239, 8
      %s241 = scalar_lea.vmem %s6, %s240
      %s242 = smul.u32 8, %s17
      %p243 = scmp.lt.s32.totalorder %s242, 15
      %s244 = scalar_select %p243, %s242, 15
      %s245 = smul.addr %s244, 8
      %s246 = scalar_lea.vmem %s0, %s245
      %s247 = smul.u32 8, %s17
      %p248 = scmp.lt.s32.totalorder %s17, 1
      %s249 = scalar_select %p248, %s17, 1
      %s250 = smul.addr %s249, 8
      %s251 = scalar_lea.vmem %s6, %s250
      %v253 = vld [vmem:[%s246] sm:$0xff]
      %v254 = vld [vmem:[%s246 + $0x8] sm:$0xff]
      %v255 = vld [vmem:[%s246 + $0x10] sm:$0xff]
      %v256 = vld [vmem:[%s246 + $0x18] sm:$0xff]
      %v257 = vld [vmem:[%s246 + $0x20] sm:$0xff]
      %v258 = vld [vmem:[%s246 + $0x28] sm:$0xff]
      %v259 = vld [vmem:[%s246 + $0x30] sm:$0xff]
      %v260 = vld [vmem:[%s246 + $0x38] sm:$0xff]
      %v261 = vlaneseq
      %v262 = vand.u32 %v261, 127
      %263 = vset.pattern.permute.xlu0 0
      %264 = vperm.xlu0 %263, %v253
      %v265 = vpop.permute.xlu0 %264
      %266 = vset.pattern.permute.xlu0 0
      %267 = vperm.xlu0 %266, %v254
      %v268 = vpop.permute.xlu0 %267
      %269 = vset.pattern.permute.xlu0 0
      %270 = vperm.xlu0 %269, %v255
      %v271 = vpop.permute.xlu0 %270
      %272 = vset.pattern.permute.xlu0 0
      %273 = vperm.xlu0 %272, %v256
      %v274 = vpop.permute.xlu0 %273
      %275 = vset.pattern.permute.xlu0 0
      %276 = vperm.xlu0 %275, %v257
      %v277 = vpop.permute.xlu0 %276
      %278 = vset.pattern.permute.xlu0 0
      %279 = vperm.xlu0 %278, %v258
      %v280 = vpop.permute.xlu0 %279
      %281 = vset.pattern.permute.xlu0 0
      %282 = vperm.xlu0 %281, %v259
      %v283 = vpop.permute.xlu0 %282
      %284 = vset.pattern.permute.xlu0 0
      %285 = vperm.xlu0 %284, %v260
      %v286 = vpop.permute.xlu0 %285
      %vm287 = vcmp.eq.s32.totalorder %v262, %v265
      %vm288 = vcmp.eq.s32.totalorder %v262, %v268
      %vm289 = vcmp.eq.s32.totalorder %v262, %v271
      %vm290 = vcmp.eq.s32.totalorder %v262, %v274
      %vm291 = vcmp.eq.s32.totalorder %v262, %v277
      %vm292 = vcmp.eq.s32.totalorder %v262, %v280
      %vm293 = vcmp.eq.s32.totalorder %v262, %v283
      %vm294 = vcmp.eq.s32.totalorder %v262, %v286
      %v295 = vsel %vm287, 1, 0
      %v296 = vsel %vm288, 1, 0
      %v297 = vsel %vm289, 1, 0
      %v298 = vsel %vm290, 1, 0
      %v299 = vsel %vm291, 1, 0
      %v300 = vsel %vm292, 1, 0
      %v301 = vsel %vm293, 1, 0
      %v302 = vsel %vm294, 1, 0
      %v303 = vcvt.s32.f32 %v295
      %v304 = vcvt.s32.f32 %v296
      %v305 = vcvt.s32.f32 %v297
      %v306 = vcvt.s32.f32 %v298
      %v307 = vcvt.s32.f32 %v299
      %v308 = vcvt.s32.f32 %v300
      %v309 = vcvt.s32.f32 %v301
      %v310 = vcvt.s32.f32 %v302
      %v311 = vpack.c.bf16 %v304, %v303
      %v312 = vpack.c.bf16 %v306, %v305
      %v313 = vpack.c.bf16 %v308, %v307
      %v314 = vpack.c.bf16 %v310, %v309
      %v315 = vld [vmem:[%s1] sm:$0xf]
      %v316 = vld [vmem:[%s1 + $0x4] sm:$0xf]
      %v317 = vld [vmem:[%s1 + $0x8] sm:$0xf]
      %v318 = vld [vmem:[%s1 + $0xc] sm:$0xf]
      %v319 = vld [vmem:[%s1 + $0x10] sm:$0xf]
      %v320 = vld [vmem:[%s1 + $0x14] sm:$0xf]
      %v321 = vld [vmem:[%s1 + $0x18] sm:$0xf]
      %v322 = vld [vmem:[%s1 + $0x1c] sm:$0xf]
      %v323 = vld [vmem:[%s1 + $0x20] sm:$0xf]
      %v324 = vld [vmem:[%s1 + $0x24] sm:$0xf]
      %v325 = vld [vmem:[%s1 + $0x28] sm:$0xf]
      %v326 = vld [vmem:[%s1 + $0x2c] sm:$0xf]
      %v327 = vld [vmem:[%s1 + $0x30] sm:$0xf]
      %v328 = vld [vmem:[%s1 + $0x34] sm:$0xf]
      %v329 = vld [vmem:[%s1 + $0x38] sm:$0xf]
      %v330 = vld [vmem:[%s1 + $0x3c] sm:$0xf]
      %v347 = vunpack.c.l.b16 %v315
      %v348 = vunpack.c.l.b16 %v316
      %v349 = vunpack.c.l.b16 %v317
      %v350 = vunpack.c.l.b16 %v318
      %v351 = vunpack.c.l.b16 %v319
      %v352 = vunpack.c.l.b16 %v320
      %v353 = vunpack.c.l.b16 %v321
      %v354 = vunpack.c.l.b16 %v322
      %v355 = vunpack.c.l.b16 %v323
      %v356 = vunpack.c.l.b16 %v324
      %v357 = vunpack.c.l.b16 %v325
      %v358 = vunpack.c.l.b16 %v326
      %v359 = vunpack.c.l.b16 %v327
      %v360 = vunpack.c.l.b16 %v328
      %v361 = vunpack.c.l.b16 %v329
      %v362 = vunpack.c.l.b16 %v330
      %v363 = vpack.c.b16 %v348, %v347
      %v364 = vpack.c.b16 %v350, %v349
      %v365 = vpack.c.b16 %v352, %v351
      %v366 = vpack.c.b16 %v354, %v353
      %v367 = vpack.c.b16 %v356, %v355
      %v368 = vpack.c.b16 %v358, %v357
      %v369 = vpack.c.b16 %v360, %v359
      %v370 = vpack.c.b16 %v362, %v361
      %379 = vmatprep.subr.bf16.mxu0 0
      %380 = vmatpush1.bf16.msra.mxu0 %v363
      %381 = vmatprep.subr.bf16.mxu0 0
      %382 = vmatpush1.bf16.msra.mxu0 %v364
      %383 = vmatprep.subr.bf16.mxu0 0
      %384 = vmatpush1.bf16.msra.mxu0 %v365
      %385 = vmatprep.subr.bf16.mxu0 0
      %386 = vmatpush1.bf16.msra.mxu0 %v366
      %387 = vmatprep.subr.bf16.mxu0 0
      %388 = vmatpush1.bf16.msra.mxu0 %v367
      %389 = vmatprep.subr.bf16.mxu0 0
      %390 = vmatpush1.bf16.msra.mxu0 %v368
      %391 = vmatprep.subr.bf16.mxu0 0
      %392 = vmatpush1.bf16.msra.mxu0 %v369
      %393 = vmatprep.subr.bf16.mxu0 0
      %394 = vmatpush1.bf16.msra.mxu0 %v370
      %395 = vmatprep.subr.bf16.mxu0 0
      %396 = vmatpush1.bf16.msra.mxu0 0
      %397 = vmatprep.subr.bf16.mxu0 0
      %398 = vmatpush1.bf16.msra.mxu0 0
      %399 = vmatprep.subr.bf16.mxu0 0
      %400 = vmatpush1.bf16.msra.mxu0 0
      %401 = vmatprep.subr.bf16.mxu0 0
      %402 = vmatpush1.bf16.msra.mxu0 0
      %403 = vmatprep.subr.bf16.mxu0 0
      %404 = vmatpush1.bf16.msra.mxu0 0
      %405 = vmatprep.subr.bf16.mxu0 0
      %406 = vmatpush1.bf16.msra.mxu0 0
      %407 = vmatprep.subr.bf16.mxu0 0
      %408 = vmatpush1.bf16.msra.mxu0 0
      %409 = vmatprep.subr.bf16.mxu0 0
      %410 = vmatpush1.bf16.msra.mxu0 0
      %411 = vmatprep.mubr.bf16.mxu0 0
      %412 = vmatmul.mubr.bf16.gmra.mrb[0].mxu0 %v311
      %v413 = vpop.f32.mrb[0].mxu0
      %v414 = vadd.f32 0.0, %v413
      %v415 = vpop.f32.mrb[0].mxu0
      %v416 = vpop.f32.mrb[0].mxu0
      %v417 = vadd.f32 0.0, %v416
      %v418 = vpop.f32.mrb[0].mxu0
      %419 = vmatprep.mubr.bf16.mxu0 0
      %420 = vmatmul.mubr.bf16.gmra.mrb[0].mxu0 %v312
      %v421 = vpop.f32.mrb[0].mxu0
      %v422 = vadd.f32 0.0, %v421
      %v423 = vpop.f32.mrb[0].mxu0
      %v424 = vpop.f32.mrb[0].mxu0
      %v425 = vadd.f32 0.0, %v424
      %v426 = vpop.f32.mrb[0].mxu0
      %427 = vmatprep.mubr.bf16.mxu0 0
      %428 = vmatmul.mubr.bf16.gmra.mrb[0].mxu0 %v313
      %v429 = vpop.f32.mrb[0].mxu0
      %v430 = vadd.f32 0.0, %v429
      %v431 = vpop.f32.mrb[0].mxu0
      %v432 = vpop.f32.mrb[0].mxu0
      %v433 = vadd.f32 0.0, %v432
      %v434 = vpop.f32.mrb[0].mxu0
      %435 = vmatprep.mubr.bf16.mxu0 0
      %436 = vmatmul.mubr.bf16.gmra.mrb[0].mxu0 %v314
      %v437 = vpop.f32.mrb[0].mxu0
      %v438 = vadd.f32 0.0, %v437
      %v439 = vpop.f32.mrb[0].mxu0
      %v440 = vpop.f32.mrb[0].mxu0
      %v441 = vadd.f32 0.0, %v440
      %v442 = vpop.f32.mrb[0].mxu0
      %443 = vdwg.mxu0
      %v444 = vpack.c.bf16 %v417, %v414
      %v445 = vpack.c.bf16 %v425, %v422
      %v446 = vpack.c.bf16 %v433, %v430
      %v447 = vpack.c.bf16 %v441, %v438
      %v448 = vld [vmem:[%s2] sm:$0xf]
      %v449 = vld [vmem:[%s2 + $0x4] sm:$0xf]
      %v450 = vld [vmem:[%s2 + $0x8] sm:$0xf]
      %v451 = vld [vmem:[%s2 + $0xc] sm:$0xf]
      %v452 = vld [vmem:[%s2 + $0x10] sm:$0xf]
      %v453 = vld [vmem:[%s2 + $0x14] sm:$0xf]
      %v454 = vld [vmem:[%s2 + $0x18] sm:$0xf]
      %v455 = vld [vmem:[%s2 + $0x1c] sm:$0xf]
      %v456 = vld [vmem:[%s2 + $0x20] sm:$0xf]
      %v457 = vld [vmem:[%s2 + $0x24] sm:$0xf]
      %v458 = vld [vmem:[%s2 + $0x28] sm:$0xf]
      %v459 = vld [vmem:[%s2 + $0x2c] sm:$0xf]
      %v460 = vld [vmem:[%s2 + $0x30] sm:$0xf]
      %v461 = vld [vmem:[%s2 + $0x34] sm:$0xf]
      %v462 = vld [vmem:[%s2 + $0x38] sm:$0xf]
      %v463 = vld [vmem:[%s2 + $0x3c] sm:$0xf]
      %v464 = vld [vmem:[%s3] sm:$0x1]
      %v466 = vlaneseq
      %v467 = vshrl.u32 %v466, 7
      %v468 = vsub.s32 0, %v467
      %v469 = vrot.slane %v464, %v468
      %v487 = vunpack.c.l.b16 %v448
      %v488 = vunpack.c.l.b16 %v449
      %v489 = vunpack.c.l.b16 %v450
      %v490 = vunpack.c.l.b16 %v451
      %v491 = vunpack.c.l.b16 %v452
      %v492 = vunpack.c.l.b16 %v453
      %v493 = vunpack.c.l.b16 %v454
      %v494 = vunpack.c.l.b16 %v455
      %v495 = vunpack.c.l.b16 %v456
      %v496 = vunpack.c.l.b16 %v457
      %v497 = vunpack.c.l.b16 %v458
      %v498 = vunpack.c.l.b16 %v459
      %v499 = vunpack.c.l.b16 %v460
      %v500 = vunpack.c.l.b16 %v461
      %v501 = vunpack.c.l.b16 %v462
      %v502 = vunpack.c.l.b16 %v463
      %v503 = vpack.c.b16 %v488, %v487
      %v504 = vpack.c.b16 %v490, %v489
      %v505 = vpack.c.b16 %v492, %v491
      %v506 = vpack.c.b16 %v494, %v493
      %v507 = vpack.c.b16 %v496, %v495
      %v508 = vpack.c.b16 %v498, %v497
      %v509 = vpack.c.b16 %v500, %v499
      %v510 = vpack.c.b16 %v502, %v501
      %519 = vmatprep.subr.bf16.mxu0 0
      %520 = vmatpush1.bf16.msra.mxu0 %v503
      %521 = vmatprep.subr.bf16.mxu0 0
      %522 = vmatpush1.bf16.msra.mxu0 %v504
      %523 = vmatprep.subr.bf16.mxu0 0
      %524 = vmatpush1.bf16.msra.mxu0 %v505
      %525 = vmatprep.subr.bf16.mxu0 0
      %526 = vmatpush1.bf16.msra.mxu0 %v506
      %527 = vmatprep.subr.bf16.mxu0 0
      %528 = vmatpush1.bf16.msra.mxu0 %v507
      %529 = vmatprep.subr.bf16.mxu0 0
      %530 = vmatpush1.bf16.msra.mxu0 %v508
      %531 = vmatprep.subr.bf16.mxu0 0
      %532 = vmatpush1.bf16.msra.mxu0 %v509
      %533 = vmatprep.subr.bf16.mxu0 0
      %534 = vmatpush1.bf16.msra.mxu0 %v510
      %535 = vmatprep.subr.bf16.mxu0 0
      %536 = vmatpush1.bf16.msra.mxu0 0
      %537 = vmatprep.subr.bf16.mxu0 0
      %538 = vmatpush1.bf16.msra.mxu0 0
      %539 = vmatprep.subr.bf16.mxu0 0
      %540 = vmatpush1.bf16.msra.mxu0 0
      %541 = vmatprep.subr.bf16.mxu0 0
      %542 = vmatpush1.bf16.msra.mxu0 0
      %543 = vmatprep.subr.bf16.mxu0 0
      %544 = vmatpush1.bf16.msra.mxu0 0
      %545 = vmatprep.subr.bf16.mxu0 0
      %546 = vmatpush1.bf16.msra.mxu0 0
      %547 = vmatprep.subr.bf16.mxu0 0
      %548 = vmatpush1.bf16.msra.mxu0 0
      %549 = vmatprep.subr.bf16.mxu0 0
      %550 = vmatpush1.bf16.msra.mxu0 0
      %551 = vmatprep.mubr.bf16.mxu0 0
      %552 = vmatmul.mubr.bf16.gmra.mrb[0].mxu0 %v444
      %v553 = vpop.f32.mrb[0].mxu0
      %v554 = vadd.f32 %v469, %v553
      %v555 = vpop.f32.mrb[0].mxu0
      %v556 = vpop.f32.mrb[0].mxu0
      %v557 = vadd.f32 %v469, %v556
      %v558 = vpop.f32.mrb[0].mxu0
      %559 = vmatprep.mubr.bf16.mxu0 0
      %560 = vmatmul.mubr.bf16.gmra.mrb[0].mxu0 %v445
      %v561 = vpop.f32.mrb[0].mxu0
      %v562 = vadd.f32 %v469, %v561
      %v563 = vpop.f32.mrb[0].mxu0
      %v564 = vpop.f32.mrb[0].mxu0
      %v565 = vadd.f32 %v469, %v564
      %v566 = vpop.f32.mrb[0].mxu0
      %567 = vmatprep.mubr.bf16.mxu0 0
      %568 = vmatmul.mubr.bf16.gmra.mrb[0].mxu0 %v446
      %v569 = vpop.f32.mrb[0].mxu0
      %v570 = vadd.f32 %v469, %v569
      %v571 = vpop.f32.mrb[0].mxu0
      %v572 = vpop.f32.mrb[0].mxu0
      %v573 = vadd.f32 %v469, %v572
      %v574 = vpop.f32.mrb[0].mxu0
      %575 = vmatprep.mubr.bf16.mxu0 0
      %576 = vmatmul.mubr.bf16.gmra.mrb[0].mxu0 %v447
      %v577 = vpop.f32.mrb[0].mxu0
      %v578 = vadd.f32 %v469, %v577
      %v579 = vpop.f32.mrb[0].mxu0
      %v580 = vpop.f32.mrb[0].mxu0
      %v581 = vadd.f32 %v469, %v580
      %v582 = vpop.f32.mrb[0].mxu0
      %583 = vdwg.mxu0
      %v584 = vmax.f32 %v554, 0.0
      %v585 = vmax.f32 %v557, 0.0
      %v586 = vmax.f32 %v562, 0.0
      %v587 = vmax.f32 %v565, 0.0
      %v588 = vmax.f32 %v570, 0.0
      %v589 = vmax.f32 %v573, 0.0
      %v590 = vmax.f32 %v578, 0.0
      %v591 = vmax.f32 %v581, 0.0
      %v592 = vrot.slane %v584, 4
      %v593 = vmax.f32 %v584, %v592
      %v594 = vrot.slane %v593, 2
      %v595 = vmax.f32 %v593, %v594
      %v596 = vrot.slane %v595, 1
      %v597 = vmax.f32 %v595, %v596
      %v598 = vrot.slane %v585, 4
      %v599 = vmax.f32 %v585, %v598
      %v600 = vrot.slane %v599, 2
      %v601 = vmax.f32 %v599, %v600
      %v602 = vrot.slane %v601, 1
      %v603 = vmax.f32 %v601, %v602
      %v604 = vrot.slane %v586, 4
      %v605 = vmax.f32 %v586, %v604
      %v606 = vrot.slane %v605, 2
      %v607 = vmax.f32 %v605, %v606
      %v608 = vrot.slane %v607, 1
      %v609 = vmax.f32 %v607, %v608
      %v610 = vrot.slane %v587, 4
      %v611 = vmax.f32 %v587, %v610
      %v612 = vrot.slane %v611, 2
      %v613 = vmax.f32 %v611, %v612
      %v614 = vrot.slane %v613, 1
      %v615 = vmax.f32 %v613, %v614
      %v616 = vrot.slane %v588, 4
      %v617 = vmax.f32 %v588, %v616
      %v618 = vrot.slane %v617, 2
      %v619 = vmax.f32 %v617, %v618
      %v620 = vrot.slane %v619, 1
      %v621 = vmax.f32 %v619, %v620
      %v622 = vrot.slane %v589, 4
      %v623 = vmax.f32 %v589, %v622
      %v624 = vrot.slane %v623, 2
      %v625 = vmax.f32 %v623, %v624
      %v626 = vrot.slane %v625, 1
      %v627 = vmax.f32 %v625, %v626
      %v628 = vrot.slane %v590, 4
      %v629 = vmax.f32 %v590, %v628
      %v630 = vrot.slane %v629, 2
      %v631 = vmax.f32 %v629, %v630
      %v632 = vrot.slane %v631, 1
      %v633 = vmax.f32 %v631, %v632
      %v634 = vrot.slane %v591, 4
      %v635 = vmax.f32 %v591, %v634
      %v636 = vrot.slane %v635, 2
      %v637 = vmax.f32 %v635, %v636
      %v638 = vrot.slane %v637, 1
      %v639 = vmax.f32 %v637, %v638
      %v640 = vpack.c.bf16 %v597, %v597
      %v641 = vpack.c.bf16 %v603, %v603
      %v642 = vpack.c.bf16 %v609, %v609
      %v643 = vpack.c.bf16 %v615, %v615
      %v644 = vpack.c.bf16 %v621, %v621
      %v645 = vpack.c.bf16 %v627, %v627
      %v646 = vpack.c.bf16 %v633, %v633
      %v647 = vpack.c.bf16 %v639, %v639
      %v648 = vld [vmem:[%s4] sm:$0xf]
      %v649 = vld [vmem:[%s4 + $0x4] sm:$0xf]
      %v650 = vld [vmem:[%s4 + $0x8] sm:$0xf]
      %v651 = vld [vmem:[%s4 + $0xc] sm:$0xf]
      %v652 = vld [vmem:[%s4 + $0x10] sm:$0xf]
      %v653 = vld [vmem:[%s4 + $0x14] sm:$0xf]
      %v654 = vld [vmem:[%s4 + $0x18] sm:$0xf]
      %v655 = vld [vmem:[%s4 + $0x1c] sm:$0xf]
      %v656 = vld [vmem:[%s4 + $0x20] sm:$0xf]
      %v657 = vld [vmem:[%s4 + $0x24] sm:$0xf]
      %v658 = vld [vmem:[%s4 + $0x28] sm:$0xf]
      %v659 = vld [vmem:[%s4 + $0x2c] sm:$0xf]
      %v660 = vld [vmem:[%s4 + $0x30] sm:$0xf]
      %v661 = vld [vmem:[%s4 + $0x34] sm:$0xf]
      %v662 = vld [vmem:[%s4 + $0x38] sm:$0xf]
      %v663 = vld [vmem:[%s4 + $0x3c] sm:$0xf]
      %v664 = vld [vmem:[%s5] sm:$0x1]
      %v666 = vlaneseq
      %v667 = vshrl.u32 %v666, 7
      %v668 = vsub.s32 0, %v667
      %v669 = vrot.slane %v664, %v668
      %v679 = vunpack.c.l.b16 %v640
      %v680 = vunpack.c.l.b16 %v641
      %v681 = vunpack.c.l.b16 %v642
      %v682 = vunpack.c.l.b16 %v643
      %v683 = vunpack.c.l.b16 %v644
      %v684 = vunpack.c.l.b16 %v645
      %v685 = vunpack.c.l.b16 %v646
      %v686 = vunpack.c.l.b16 %v647
      %vm687 = vcmask 1041409
      %v688 = vsel %vm687, %v680, %v679
      %vm689 = vcmask 1042434
      %v690 = vsel %vm689, %v681, %v688
      %vm691 = vcmask 1043459
      %v692 = vsel %vm691, %v682, %v690
      %vm693 = vcmask 1044484
      %v694 = vsel %vm693, %v683, %v692
      %vm695 = vcmask 1045509
      %v696 = vsel %vm695, %v684, %v694
      %vm697 = vcmask 1046534
      %v698 = vsel %vm697, %v685, %v696
      %vm699 = vcmask 1047559
      %v700 = vsel %vm699, %v686, %v698
      %v701 = vpack.c.b16 %v700, %v700
      %v719 = vunpack.c.l.b16 %v648
      %v720 = vunpack.c.l.b16 %v649
      %v721 = vunpack.c.l.b16 %v650
      %v722 = vunpack.c.l.b16 %v651
      %v723 = vunpack.c.l.b16 %v652
      %v724 = vunpack.c.l.b16 %v653
      %v725 = vunpack.c.l.b16 %v654
      %v726 = vunpack.c.l.b16 %v655
      %v727 = vunpack.c.l.b16 %v656
      %v728 = vunpack.c.l.b16 %v657
      %v729 = vunpack.c.l.b16 %v658
      %v730 = vunpack.c.l.b16 %v659
      %v731 = vunpack.c.l.b16 %v660
      %v732 = vunpack.c.l.b16 %v661
      %v733 = vunpack.c.l.b16 %v662
      %v734 = vunpack.c.l.b16 %v663
      %v735 = vpack.c.b16 %v720, %v719
      %v736 = vpack.c.b16 %v722, %v721
      %v737 = vpack.c.b16 %v724, %v723
      %v738 = vpack.c.b16 %v726, %v725
      %v739 = vpack.c.b16 %v728, %v727
      %v740 = vpack.c.b16 %v730, %v729
      %v741 = vpack.c.b16 %v732, %v731
      %v742 = vpack.c.b16 %v734, %v733
      %751 = vmatprep.subr.bf16.mxu0 0
      %752 = vmatpush1.bf16.msra.mxu0 %v735
      %753 = vmatprep.subr.bf16.mxu0 0
      %754 = vmatpush1.bf16.msra.mxu0 %v736
      %755 = vmatprep.subr.bf16.mxu0 0
      %756 = vmatpush1.bf16.msra.mxu0 %v737
      %757 = vmatprep.subr.bf16.mxu0 0
      %758 = vmatpush1.bf16.msra.mxu0 %v738
      %759 = vmatprep.subr.bf16.mxu0 0
      %760 = vmatpush1.bf16.msra.mxu0 %v739
      %761 = vmatprep.subr.bf16.mxu0 0
      %762 = vmatpush1.bf16.msra.mxu0 %v740
      %763 = vmatprep.subr.bf16.mxu0 0
      %764 = vmatpush1.bf16.msra.mxu0 %v741
      %765 = vmatprep.subr.bf16.mxu0 0
      %766 = vmatpush1.bf16.msra.mxu0 %v742
      %767 = vmatprep.subr.bf16.mxu0 0
      %768 = vmatpush1.bf16.msra.mxu0 0
      %769 = vmatprep.subr.bf16.mxu0 0
      %770 = vmatpush1.bf16.msra.mxu0 0
      %771 = vmatprep.subr.bf16.mxu0 0
      %772 = vmatpush1.bf16.msra.mxu0 0
      %773 = vmatprep.subr.bf16.mxu0 0
      %774 = vmatpush1.bf16.msra.mxu0 0
      %775 = vmatprep.subr.bf16.mxu0 0
      %776 = vmatpush1.bf16.msra.mxu0 0
      %777 = vmatprep.subr.bf16.mxu0 0
      %778 = vmatpush1.bf16.msra.mxu0 0
      %779 = vmatprep.subr.bf16.mxu0 0
      %780 = vmatpush1.bf16.msra.mxu0 0
      %781 = vmatprep.subr.bf16.mxu0 0
      %782 = vmatpush1.bf16.msra.mxu0 0
      %783 = vmatprep.mubr.bf16.mxu0 0
      %784 = vmatmul.mubr.bf16.gmra.mrb[0].mxu0 %v701
      %v785 = vpop.f32.mrb[0].mxu0
      %v786 = vadd.f32 %v669, %v785
      %v787 = vpop.f32.mrb[0].mxu0
      %v788 = vpop.f32.mrb[0].mxu0
      %v789 = vpop.f32.mrb[0].mxu0
      %790 = vdwg.mxu0
      %791 = vst [vmem:[%s251] sm:$0xff] %v786
      %p792 = scmp.lt.s32.totalorder %s17, 1
      %s793 = scalar_select %p792, %s17, 1
      %s794 = smul.addr %s793, 8
      %s795 = scalar_lea.vmem %s6, %s794
      // Predicated region
      $region45: #{fasttext_forward.1} parent=43 // pred_check
        %p796 = pneg %p166
      $region46: #{fasttext_forward.1} parent=43 // pred_check_branch
        %798 = sbr.rel (%p796) target = $region48
      $region47: #{fasttext_forward.1} parent=43 // pred_region
        _
      $region48: #{fasttext_forward.1} parent=43 // pred_fallthru
        _
    $region44: #{fasttext_forward.1} parent=5 // pred_fallthru
      _
    %p799 = scmp.le.s32.totalorder 2, %s12
    // Predicated region
    $region49: #{fasttext_forward.1} parent=5 // pred_check
      %p800 = pneg %p799
    $region50: #{fasttext_forward.1} parent=5 // pred_check_branch
      %802 = sbr.rel (%p800) target = $region52
    $region51: #{fasttext_forward.1} parent=5 // pred_region
      %s803 = ssub.s32 %s12, 2
      // Predicated region
      $region53: #{fasttext_forward.1} parent=51 // pred_check
        %p804 = pneg %p172
      $region54: #{fasttext_forward.1} parent=51 // pred_check_branch
        %806 = sbr.rel (%p804) target = $region56
      $region55: #{fasttext_forward.1} parent=51 // pred_region
        %p807 = scmp.lt.s32.totalorder %s18, 1
        %s808 = scalar_select %p807, %s18, 1
        %s809 = smul.addr %s808, 8
        %s810 = scalar_lea.vmem %s6, %s809
      $region56: #{fasttext_forward.1} parent=51 // pred_fallthru
        _
    $region52: #{fasttext_forward.1} parent=5 // pred_fallthru
      _
  $region6: #{fasttext_forward.1} parent=0 // loop_footer
    %s16 = sadd.s32 1, %s12
  $region7: #{fasttext_forward.1} parent=0 // loop_footer_branch
    %11 = sbr.rel target = $region3
  $region8: #{fasttext_forward.1} parent=0 // loop_exit
    _

</llo_original>
